<compile_context>
chip_gen: v5e
topology: v5e:2x2
jax: 0.10.0
libtpu: 0.0.40
codegen_flags: <defaults>
</compile_context>

<pallas_src>
import functools

import jax
import jax.numpy as jnp
from jax.experimental import pallas as pl
from jax.experimental.pallas import tpu as pltpu


def _conv1x1_add_mean_kernel(x_ref, w_ref, b_ref, other_ref,
                             v2_ref, mean_ref,
                             *, N, Cin, Cout, H, W, inv_total):
    # x_ref     : (N, Cin, H,  W )   VMEM   input x1, NCHW (unpadded)
    # w_ref     : (Cout, Cin)        SMEM   1x1 conv weight (squeezed)
    # b_ref     : (Cout, 1, 1)       VMEM   bias, pre-shaped for one broadcast
    # other_ref : (N, Cout, Hp, Wp)  VMEM   tensor added to the conv output
    # v2_ref    : (N, Cout, Hp, Wp)  VMEM   output v2 (HBM buffer aliased with `other`)
    # mean_ref  : (1, 1)             SMEM   output v3 = mean(v2)

    # Bulk init: the padded border of the 1x1 conv is just the bias, so
    # v2 = other + bias everywhere, in one vectorized statement (single
    # hoisted bias broadcast).
    v2_ref[...] = other_ref[...] + b_ref[...]

    # Add the channel contraction into the HxW interior window only.
    for n in range(N):
        xs = [x_ref[n, c] for c in range(Cin)]          # Cin x (H, W), loaded once per n
        for o in range(Cout):
            interior = w_ref[o, 0] * xs[0]              # VPU scalar-broadcast FMAs
            for c in range(1, Cin):
                interior = interior + w_ref[o, c] * xs[c]
            v2_ref[n, o, 1:1 + H, 1:1 + W] = (
                v2_ref[n, o, 1:1 + H, 1:1 + W] + interior)

    # v3 = mean(v2): one reduce over the finished v2 (XLU slot, otherwise idle).
    mean_ref[0, 0] = jnp.sum(v2_ref[...]) * inv_total


@jax.jit
def model_forward(x1, weight, bias, other):
    """Replicates Model.forward(x1, other). Returns (v3, v2), v2 in NCHW."""
    N, Cin, H, W = x1.shape
    Cout = weight.shape[0]
    Hp, Wp = H + 2, W + 2              # padding=1, kernel=1, stride=1

    w2d = weight.reshape(Cout, Cin)    # drop trailing 1x1 dims (free reshape)
    b3d = bias.reshape(Cout, 1, 1)     # free reshape; broadcast happens once in-kernel

    kernel = functools.partial(
        _conv1x1_add_mean_kernel,
        N=N, Cin=Cin, Cout=Cout, H=H, W=W,
        inv_total=1.0 / float(N * Cout * Hp * Wp))

    v2, mean = pl.pallas_call(
        kernel,
        out_shape=(
            jax.ShapeDtypeStruct((N, Cout, Hp, Wp), jnp.float32),
            jax.ShapeDtypeStruct((1, 1), jnp.float32),
        ),
        # Tiny problem: single gridless invocation, whole arrays resident.
        in_specs=[
            pl.BlockSpec(memory_space=pltpu.MemorySpace.VMEM),   # x1 (NCHW)
            pl.BlockSpec(memory_space=pltpu.MemorySpace.SMEM),   # weight (Cout,Cin)
            pl.BlockSpec(memory_space=pltpu.MemorySpace.VMEM),   # bias (Cout,1,1)
            pl.BlockSpec(memory_space=pltpu.MemorySpace.VMEM),   # other (NCHW)
        ],
        out_specs=(
            pl.BlockSpec(memory_space=pltpu.MemorySpace.VMEM),   # v2 (NCHW)
            pl.BlockSpec(memory_space=pltpu.MemorySpace.SMEM),   # mean scalar
        ),
        # `other` and v2 have identical shape/dtype -> reuse the buffer.
        input_output_aliases={3: 0},
    )(x1, w2d, b3d, other)

    return mean[0, 0], v2


if __name__ == "__main__":
    key = jax.random.PRNGKey(0)
    k_x, k_w, k_b, k_o = jax.random.split(key, 4)

    # Shapes implied by the module: x1 (1, 3, 5, 5); Conv2d(3, 8, 1, padding=1)
    N, Cin, H, W = 1, 3, 5, 5
    Cout = 8
    Hp, Wp = H + 2, W + 2

    x1 = jax.random.normal(k_x, (N, Cin, H, W), dtype=jnp.float32)
    # Deterministic parameter init (synthetic, not a checkpoint load).
    weight = jax.random.normal(k_w, (Cout, Cin, 1, 1), dtype=jnp.float32) * 0.1
    bias = jax.random.normal(k_b, (Cout,), dtype=jnp.float32) * 0.1
    # `other` in the PyTorch forward is torch.randn(v1.shape); generated
    # deterministically here and passed in explicitly.
    other = jax.random.normal(k_o, (N, Cout, Hp, Wp), dtype=jnp.float32)

    v3, v2 = model_forward(x1, weight, bias, other)
    jax.block_until_ready((v3, v2))

    # Lightweight correctness check against a plain-JAX reference.
    x_pad = jnp.pad(x1, ((0, 0), (0, 0), (1, 1), (1, 1)))
    v1_ref = jnp.einsum("oc,nchw->nohw", weight.reshape(Cout, Cin), x_pad) \
        + bias.reshape(1, Cout, 1, 1)
    v2_ref = v1_ref + other
    v3_ref = jnp.mean(v2_ref)
    assert v2.shape == (N, Cout, Hp, Wp)
    assert jnp.allclose(v2, v2_ref, atol=1e-5, rtol=1e-5)
    assert jnp.allclose(v3, v3_ref, atol=1e-5, rtol=1e-5)

    print("KERNEL_OK")
</pallas_src>

<mosaic_0001>
module attributes {stable_mosaic.version = 11 : i64} {
  func.func @_conv1x1_add_mean_kernel(%arg0: memref<1x3x5x5xf32, #tpu.memory_space<vmem>>, %arg1: memref<8x3xf32, #tpu.memory_space<smem>>, %arg2: memref<8x1x1xf32, #tpu.memory_space<vmem>>, %arg3: memref<1x8x7x7xf32, #tpu.memory_space<vmem>>, %arg4: memref<1x8x7x7xf32, #tpu.memory_space<vmem>>, %arg5: memref<1x1xf32, #tpu.memory_space<smem>>) attributes {dimension_semantics = [], scalar_prefetch = 0 : i64, scratch_operands = 0 : i64, tpu.core_type = #tpu.core_type<tc>} {
    %c0 = arith.constant 0 : index
    %c0_0 = arith.constant 0 : index
    %c0_1 = arith.constant 0 : index
    %c0_2 = arith.constant 0 : index
    %0 = vector.load %arg3[%c0, %c0_0, %c0_1, %c0_2] : memref<1x8x7x7xf32, #tpu.memory_space<vmem>>, vector<1x8x7x7xf32>
    %c0_3 = arith.constant 0 : index
    %c0_4 = arith.constant 0 : index
    %c0_5 = arith.constant 0 : index
    %1 = vector.load %arg2[%c0_3, %c0_4, %c0_5] : memref<8x1x1xf32, #tpu.memory_space<vmem>>, vector<8x1x1xf32>
    %2 = vector.shape_cast %1 : vector<8x1x1xf32> to vector<1x8x1x1xf32>
    %3 = vector.broadcast %2 : vector<1x8x1x1xf32> to vector<1x8x7x7xf32>
    %4 = arith.addf %0, %3 : vector<1x8x7x7xf32>
    %c0_6 = arith.constant 0 : index
    %c0_7 = arith.constant 0 : index
    %c0_8 = arith.constant 0 : index
    %c0_9 = arith.constant 0 : index
    %5 = vector.load %arg4[%c0_6, %c0_7, %c0_8, %c0_9] : memref<1x8x7x7xf32, #tpu.memory_space<vmem>>, vector<1x8x7x7xf32>
    tpu.vector_store %arg4[%c0_6, %c0_7, %c0_8, %c0_9], %4 {strides = array<i32>} : memref<1x8x7x7xf32, #tpu.memory_space<vmem>>, vector<1x8x7x7xf32>,
    %c0_10 = arith.constant 0 : index
    %c0_11 = arith.constant 0 : index
    %c0_12 = arith.constant 0 : index
    %c0_13 = arith.constant 0 : index
    %6 = vector.load %arg0[%c0_10, %c0_11, %c0_12, %c0_13] : memref<1x3x5x5xf32, #tpu.memory_space<vmem>>, vector<1x1x5x5xf32>
    %7 = vector.shape_cast %6 : vector<1x1x5x5xf32> to vector<5x5xf32>
    %c0_14 = arith.constant 0 : index
    %c1 = arith.constant 1 : index
    %c0_15 = arith.constant 0 : index
    %c0_16 = arith.constant 0 : index
    %8 = vector.load %arg0[%c0_14, %c1, %c0_15, %c0_16] : memref<1x3x5x5xf32, #tpu.memory_space<vmem>>, vector<1x1x5x5xf32>
    %9 = vector.shape_cast %8 : vector<1x1x5x5xf32> to vector<5x5xf32>
    %c0_17 = arith.constant 0 : index
    %c2 = arith.constant 2 : index
    %c0_18 = arith.constant 0 : index
    %c0_19 = arith.constant 0 : index
    %10 = vector.load %arg0[%c0_17, %c2, %c0_18, %c0_19] : memref<1x3x5x5xf32, #tpu.memory_space<vmem>>, vector<1x1x5x5xf32>
    %11 = vector.shape_cast %10 : vector<1x1x5x5xf32> to vector<5x5xf32>
    %c0_20 = arith.constant 0 : index
    %c0_21 = arith.constant 0 : index
    %12 = memref.load %arg1[%c0_20, %c0_21] : memref<8x3xf32, #tpu.memory_space<smem>>
    %13 = vector.broadcast %12 : f32 to vector<5x5xf32>
    %14 = arith.mulf %13, %7 : vector<5x5xf32>
    %c0_22 = arith.constant 0 : index
    %c1_23 = arith.constant 1 : index
    %15 = memref.load %arg1[%c0_22, %c1_23] : memref<8x3xf32, #tpu.memory_space<smem>>
    %16 = vector.broadcast %15 : f32 to vector<5x5xf32>
    %17 = arith.mulf %16, %9 : vector<5x5xf32>
    %18 = arith.addf %14, %17 : vector<5x5xf32>
    %c0_24 = arith.constant 0 : index
    %c2_25 = arith.constant 2 : index
    %19 = memref.load %arg1[%c0_24, %c2_25] : memref<8x3xf32, #tpu.memory_space<smem>>
    %20 = vector.broadcast %19 : f32 to vector<5x5xf32>
    %21 = arith.mulf %20, %11 : vector<5x5xf32>
    %22 = arith.addf %18, %21 : vector<5x5xf32>
    %c0_26 = arith.constant 0 : index
    %c0_27 = arith.constant 0 : index
    %c1_28 = arith.constant 1 : index
    %c1_29 = arith.constant 1 : index
    %23 = vector.load %arg4[%c0_26, %c0_27, %c1_28, %c1_29] : memref<1x8x7x7xf32, #tpu.memory_space<vmem>>, vector<1x1x5x5xf32>
    %24 = vector.shape_cast %23 : vector<1x1x5x5xf32> to vector<5x5xf32>
    %25 = arith.addf %24, %22 : vector<5x5xf32>
    %c0_30 = arith.constant 0 : index
    %c0_31 = arith.constant 0 : index
    %c1_32 = arith.constant 1 : index
    %c1_33 = arith.constant 1 : index
    %26 = vector.load %arg4[%c0_30, %c0_31, %c1_32, %c1_33] : memref<1x8x7x7xf32, #tpu.memory_space<vmem>>, vector<1x1x5x5xf32>
    %27 = vector.shape_cast %26 : vector<1x1x5x5xf32> to vector<5x5xf32>
    %28 = vector.shape_cast %25 : vector<5x5xf32> to vector<1x1x5x5xf32>
    tpu.vector_store %arg4[%c0_30, %c0_31, %c1_32, %c1_33], %28 {strides = array<i32>} : memref<1x8x7x7xf32, #tpu.memory_space<vmem>>, vector<1x1x5x5xf32>,
    %c1_34 = arith.constant 1 : index
    %c0_35 = arith.constant 0 : index
    %29 = memref.load %arg1[%c1_34, %c0_35] : memref<8x3xf32, #tpu.memory_space<smem>>
    %30 = vector.broadcast %29 : f32 to vector<5x5xf32>
    %31 = arith.mulf %30, %7 : vector<5x5xf32>
    %c1_36 = arith.constant 1 : index
    %c1_37 = arith.constant 1 : index
    %32 = memref.load %arg1[%c1_36, %c1_37] : memref<8x3xf32, #tpu.memory_space<smem>>
    %33 = vector.broadcast %32 : f32 to vector<5x5xf32>
    %34 = arith.mulf %33, %9 : vector<5x5xf32>
    %35 = arith.addf %31, %34 : vector<5x5xf32>
    %c1_38 = arith.constant 1 : index
    %c2_39 = arith.constant 2 : index
    %36 = memref.load %arg1[%c1_38, %c2_39] : memref<8x3xf32, #tpu.memory_space<smem>>
    %37 = vector.broadcast %36 : f32 to vector<5x5xf32>
    %38 = arith.mulf %37, %11 : vector<5x5xf32>
    %39 = arith.addf %35, %38 : vector<5x5xf32>
    %c0_40 = arith.constant 0 : index
    %c1_41 = arith.constant 1 : index
    %c1_42 = arith.constant 1 : index
    %c1_43 = arith.constant 1 : index
    %40 = vector.load %arg4[%c0_40, %c1_41, %c1_42, %c1_43] : memref<1x8x7x7xf32, #tpu.memory_space<vmem>>, vector<1x1x5x5xf32>
    %41 = vector.shape_cast %40 : vector<1x1x5x5xf32> to vector<5x5xf32>
    %42 = arith.addf %41, %39 : vector<5x5xf32>
    %c0_44 = arith.constant 0 : index
    %c1_45 = arith.constant 1 : index
    %c1_46 = arith.constant 1 : index
    %c1_47 = arith.constant 1 : index
    %43 = vector.load %arg4[%c0_44, %c1_45, %c1_46, %c1_47] : memref<1x8x7x7xf32, #tpu.memory_space<vmem>>, vector<1x1x5x5xf32>
    %44 = vector.shape_cast %43 : vector<1x1x5x5xf32> to vector<5x5xf32>
    %45 = vector.shape_cast %42 : vector<5x5xf32> to vector<1x1x5x5xf32>
    tpu.vector_store %arg4[%c0_44, %c1_45, %c1_46, %c1_47], %45 {strides = array<i32>} : memref<1x8x7x7xf32, #tpu.memory_space<vmem>>, vector<1x1x5x5xf32>,
    %c2_48 = arith.constant 2 : index
    %c0_49 = arith.constant 0 : index
    %46 = memref.load %arg1[%c2_48, %c0_49] : memref<8x3xf32, #tpu.memory_space<smem>>
    %47 = vector.broadcast %46 : f32 to vector<5x5xf32>
    %48 = arith.mulf %47, %7 : vector<5x5xf32>
    %c2_50 = arith.constant 2 : index
    %c1_51 = arith.constant 1 : index
    %49 = memref.load %arg1[%c2_50, %c1_51] : memref<8x3xf32, #tpu.memory_space<smem>>
    %50 = vector.broadcast %49 : f32 to vector<5x5xf32>
    %51 = arith.mulf %50, %9 : vector<5x5xf32>
    %52 = arith.addf %48, %51 : vector<5x5xf32>
    %c2_52 = arith.constant 2 : index
    %c2_53 = arith.constant 2 : index
    %53 = memref.load %arg1[%c2_52, %c2_53] : memref<8x3xf32, #tpu.memory_space<smem>>
    %54 = vector.broadcast %53 : f32 to vector<5x5xf32>
    %55 = arith.mulf %54, %11 : vector<5x5xf32>
    %56 = arith.addf %52, %55 : vector<5x5xf32>
    %c0_54 = arith.constant 0 : index
    %c2_55 = arith.constant 2 : index
    %c1_56 = arith.constant 1 : index
    %c1_57 = arith.constant 1 : index
    %57 = vector.load %arg4[%c0_54, %c2_55, %c1_56, %c1_57] : memref<1x8x7x7xf32, #tpu.memory_space<vmem>>, vector<1x1x5x5xf32>
    %58 = vector.shape_cast %57 : vector<1x1x5x5xf32> to vector<5x5xf32>
    %59 = arith.addf %58, %56 : vector<5x5xf32>
    %c0_58 = arith.constant 0 : index
    %c2_59 = arith.constant 2 : index
    %c1_60 = arith.constant 1 : index
    %c1_61 = arith.constant 1 : index
    %60 = vector.load %arg4[%c0_58, %c2_59, %c1_60, %c1_61] : memref<1x8x7x7xf32, #tpu.memory_space<vmem>>, vector<1x1x5x5xf32>
    %61 = vector.shape_cast %60 : vector<1x1x5x5xf32> to vector<5x5xf32>
    %62 = vector.shape_cast %59 : vector<5x5xf32> to vector<1x1x5x5xf32>
    tpu.vector_store %arg4[%c0_58, %c2_59, %c1_60, %c1_61], %62 {strides = array<i32>} : memref<1x8x7x7xf32, #tpu.memory_space<vmem>>, vector<1x1x5x5xf32>,
    %c3 = arith.constant 3 : index
    %c0_62 = arith.constant 0 : index
    %63 = memref.load %arg1[%c3, %c0_62] : memref<8x3xf32, #tpu.memory_space<smem>>
    %64 = vector.broadcast %63 : f32 to vector<5x5xf32>
    %65 = arith.mulf %64, %7 : vector<5x5xf32>
    %c3_63 = arith.constant 3 : index
    %c1_64 = arith.constant 1 : index
    %66 = memref.load %arg1[%c3_63, %c1_64] : memref<8x3xf32, #tpu.memory_space<smem>>
    %67 = vector.broadcast %66 : f32 to vector<5x5xf32>
    %68 = arith.mulf %67, %9 : vector<5x5xf32>
    %69 = arith.addf %65, %68 : vector<5x5xf32>
    %c3_65 = arith.constant 3 : index
    %c2_66 = arith.constant 2 : index
    %70 = memref.load %arg1[%c3_65, %c2_66] : memref<8x3xf32, #tpu.memory_space<smem>>
    %71 = vector.broadcast %70 : f32 to vector<5x5xf32>
    %72 = arith.mulf %71, %11 : vector<5x5xf32>
    %73 = arith.addf %69, %72 : vector<5x5xf32>
    %c0_67 = arith.constant 0 : index
    %c3_68 = arith.constant 3 : index
    %c1_69 = arith.constant 1 : index
    %c1_70 = arith.constant 1 : index
    %74 = vector.load %arg4[%c0_67, %c3_68, %c1_69, %c1_70] : memref<1x8x7x7xf32, #tpu.memory_space<vmem>>, vector<1x1x5x5xf32>
    %75 = vector.shape_cast %74 : vector<1x1x5x5xf32> to vector<5x5xf32>
    %76 = arith.addf %75, %73 : vector<5x5xf32>
    %c0_71 = arith.constant 0 : index
    %c3_72 = arith.constant 3 : index
    %c1_73 = arith.constant 1 : index
    %c1_74 = arith.constant 1 : index
    %77 = vector.load %arg4[%c0_71, %c3_72, %c1_73, %c1_74] : memref<1x8x7x7xf32, #tpu.memory_space<vmem>>, vector<1x1x5x5xf32>
    %78 = vector.shape_cast %77 : vector<1x1x5x5xf32> to vector<5x5xf32>
    %79 = vector.shape_cast %76 : vector<5x5xf32> to vector<1x1x5x5xf32>
    tpu.vector_store %arg4[%c0_71, %c3_72, %c1_73, %c1_74], %79 {strides = array<i32>} : memref<1x8x7x7xf32, #tpu.memory_space<vmem>>, vector<1x1x5x5xf32>,
    %c4 = arith.constant 4 : index
    %c0_75 = arith.constant 0 : index
    %80 = memref.load %arg1[%c4, %c0_75] : memref<8x3xf32, #tpu.memory_space<smem>>
    %81 = vector.broadcast %80 : f32 to vector<5x5xf32>
    %82 = arith.mulf %81, %7 : vector<5x5xf32>
    %c4_76 = arith.constant 4 : index
    %c1_77 = arith.constant 1 : index
    %83 = memref.load %arg1[%c4_76, %c1_77] : memref<8x3xf32, #tpu.memory_space<smem>>
    %84 = vector.broadcast %83 : f32 to vector<5x5xf32>
    %85 = arith.mulf %84, %9 : vector<5x5xf32>
    %86 = arith.addf %82, %85 : vector<5x5xf32>
    %c4_78 = arith.constant 4 : index
    %c2_79 = arith.constant 2 : index
    %87 = memref.load %arg1[%c4_78, %c2_79] : memref<8x3xf32, #tpu.memory_space<smem>>
    %88 = vector.broadcast %87 : f32 to vector<5x5xf32>
    %89 = arith.mulf %88, %11 : vector<5x5xf32>
    %90 = arith.addf %86, %89 : vector<5x5xf32>
    %c0_80 = arith.constant 0 : index
    %c4_81 = arith.constant 4 : index
    %c1_82 = arith.constant 1 : index
    %c1_83 = arith.constant 1 : index
    %91 = vector.load %arg4[%c0_80, %c4_81, %c1_82, %c1_83] : memref<1x8x7x7xf32, #tpu.memory_space<vmem>>, vector<1x1x5x5xf32>
    %92 = vector.shape_cast %91 : vector<1x1x5x5xf32> to vector<5x5xf32>
    %93 = arith.addf %92, %90 : vector<5x5xf32>
    %c0_84 = arith.constant 0 : index
    %c4_85 = arith.constant 4 : index
    %c1_86 = arith.constant 1 : index
    %c1_87 = arith.constant 1 : index
    %94 = vector.load %arg4[%c0_84, %c4_85, %c1_86, %c1_87] : memref<1x8x7x7xf32, #tpu.memory_space<vmem>>, vector<1x1x5x5xf32>
    %95 = vector.shape_cast %94 : vector<1x1x5x5xf32> to vector<5x5xf32>
    %96 = vector.shape_cast %93 : vector<5x5xf32> to vector<1x1x5x5xf32>
    tpu.vector_store %arg4[%c0_84, %c4_85, %c1_86, %c1_87], %96 {strides = array<i32>} : memref<1x8x7x7xf32, #tpu.memory_space<vmem>>, vector<1x1x5x5xf32>,
    %c5 = arith.constant 5 : index
    %c0_88 = arith.constant 0 : index
    %97 = memref.load %arg1[%c5, %c0_88] : memref<8x3xf32, #tpu.memory_space<smem>>
    %98 = vector.broadcast %97 : f32 to vector<5x5xf32>
    %99 = arith.mulf %98, %7 : vector<5x5xf32>
    %c5_89 = arith.constant 5 : index
    %c1_90 = arith.constant 1 : index
    %100 = memref.load %arg1[%c5_89, %c1_90] : memref<8x3xf32, #tpu.memory_space<smem>>
    %101 = vector.broadcast %100 : f32 to vector<5x5xf32>
    %102 = arith.mulf %101, %9 : vector<5x5xf32>
    %103 = arith.addf %99, %102 : vector<5x5xf32>
    %c5_91 = arith.constant 5 : index
    %c2_92 = arith.constant 2 : index
    %104 = memref.load %arg1[%c5_91, %c2_92] : memref<8x3xf32, #tpu.memory_space<smem>>
    %105 = vector.broadcast %104 : f32 to vector<5x5xf32>
    %106 = arith.mulf %105, %11 : vector<5x5xf32>
    %107 = arith.addf %103, %106 : vector<5x5xf32>
    %c0_93 = arith.constant 0 : index
    %c5_94 = arith.constant 5 : index
    %c1_95 = arith.constant 1 : index
    %c1_96 = arith.constant 1 : index
    %108 = vector.load %arg4[%c0_93, %c5_94, %c1_95, %c1_96] : memref<1x8x7x7xf32, #tpu.memory_space<vmem>>, vector<1x1x5x5xf32>
    %109 = vector.shape_cast %108 : vector<1x1x5x5xf32> to vector<5x5xf32>
    %110 = arith.addf %109, %107 : vector<5x5xf32>
    %c0_97 = arith.constant 0 : index
    %c5_98 = arith.constant 5 : index
    %c1_99 = arith.constant 1 : index
    %c1_100 = arith.constant 1 : index
    %111 = vector.load %arg4[%c0_97, %c5_98, %c1_99, %c1_100] : memref<1x8x7x7xf32, #tpu.memory_space<vmem>>, vector<1x1x5x5xf32>
    %112 = vector.shape_cast %111 : vector<1x1x5x5xf32> to vector<5x5xf32>
    %113 = vector.shape_cast %110 : vector<5x5xf32> to vector<1x1x5x5xf32>
    tpu.vector_store %arg4[%c0_97, %c5_98, %c1_99, %c1_100], %113 {strides = array<i32>} : memref<1x8x7x7xf32, #tpu.memory_space<vmem>>, vector<1x1x5x5xf32>,
    %c6 = arith.constant 6 : index
    %c0_101 = arith.constant 0 : index
    %114 = memref.load %arg1[%c6, %c0_101] : memref<8x3xf32, #tpu.memory_space<smem>>
    %115 = vector.broadcast %114 : f32 to vector<5x5xf32>
    %116 = arith.mulf %115, %7 : vector<5x5xf32>
    %c6_102 = arith.constant 6 : index
    %c1_103 = arith.constant 1 : index
    %117 = memref.load %arg1[%c6_102, %c1_103] : memref<8x3xf32, #tpu.memory_space<smem>>
    %118 = vector.broadcast %117 : f32 to vector<5x5xf32>
    %119 = arith.mulf %118, %9 : vector<5x5xf32>
    %120 = arith.addf %116, %119 : vector<5x5xf32>
    %c6_104 = arith.constant 6 : index
    %c2_105 = arith.constant 2 : index
    %121 = memref.load %arg1[%c6_104, %c2_105] : memref<8x3xf32, #tpu.memory_space<smem>>
    %122 = vector.broadcast %121 : f32 to vector<5x5xf32>
    %123 = arith.mulf %122, %11 : vector<5x5xf32>
    %124 = arith.addf %120, %123 : vector<5x5xf32>
    %c0_106 = arith.constant 0 : index
    %c6_107 = arith.constant 6 : index
    %c1_108 = arith.constant 1 : index
    %c1_109 = arith.constant 1 : index
    %125 = vector.load %arg4[%c0_106, %c6_107, %c1_108, %c1_109] : memref<1x8x7x7xf32, #tpu.memory_space<vmem>>, vector<1x1x5x5xf32>
    %126 = vector.shape_cast %125 : vector<1x1x5x5xf32> to vector<5x5xf32>
    %127 = arith.addf %126, %124 : vector<5x5xf32>
    %c0_110 = arith.constant 0 : index
    %c6_111 = arith.constant 6 : index
    %c1_112 = arith.constant 1 : index
    %c1_113 = arith.constant 1 : index
    %128 = vector.load %arg4[%c0_110, %c6_111, %c1_112, %c1_113] : memref<1x8x7x7xf32, #tpu.memory_space<vmem>>, vector<1x1x5x5xf32>
    %129 = vector.shape_cast %128 : vector<1x1x5x5xf32> to vector<5x5xf32>
    %130 = vector.shape_cast %127 : vector<5x5xf32> to vector<1x1x5x5xf32>
    tpu.vector_store %arg4[%c0_110, %c6_111, %c1_112, %c1_113], %130 {strides = array<i32>} : memref<1x8x7x7xf32, #tpu.memory_space<vmem>>, vector<1x1x5x5xf32>,
    %c7 = arith.constant 7 : index
    %c0_114 = arith.constant 0 : index
    %131 = memref.load %arg1[%c7, %c0_114] : memref<8x3xf32, #tpu.memory_space<smem>>
    %132 = vector.broadcast %131 : f32 to vector<5x5xf32>
    %133 = arith.mulf %132, %7 : vector<5x5xf32>
    %c7_115 = arith.constant 7 : index
    %c1_116 = arith.constant 1 : index
    %134 = memref.load %arg1[%c7_115, %c1_116] : memref<8x3xf32, #tpu.memory_space<smem>>
    %135 = vector.broadcast %134 : f32 to vector<5x5xf32>
    %136 = arith.mulf %135, %9 : vector<5x5xf32>
    %137 = arith.addf %133, %136 : vector<5x5xf32>
    %c7_117 = arith.constant 7 : index
    %c2_118 = arith.constant 2 : index
    %138 = memref.load %arg1[%c7_117, %c2_118] : memref<8x3xf32, #tpu.memory_space<smem>>
    %139 = vector.broadcast %138 : f32 to vector<5x5xf32>
    %140 = arith.mulf %139, %11 : vector<5x5xf32>
    %141 = arith.addf %137, %140 : vector<5x5xf32>
    %c0_119 = arith.constant 0 : index
    %c7_120 = arith.constant 7 : index
    %c1_121 = arith.constant 1 : index
    %c1_122 = arith.constant 1 : index
    %142 = vector.load %arg4[%c0_119, %c7_120, %c1_121, %c1_122] : memref<1x8x7x7xf32, #tpu.memory_space<vmem>>, vector<1x1x5x5xf32>
    %143 = vector.shape_cast %142 : vector<1x1x5x5xf32> to vector<5x5xf32>
    %144 = arith.addf %143, %141 : vector<5x5xf32>
    %c0_123 = arith.constant 0 : index
    %c7_124 = arith.constant 7 : index
    %c1_125 = arith.constant 1 : index
    %c1_126 = arith.constant 1 : index
    %145 = vector.load %arg4[%c0_123, %c7_124, %c1_125, %c1_126] : memref<1x8x7x7xf32, #tpu.memory_space<vmem>>, vector<1x1x5x5xf32>
    %146 = vector.shape_cast %145 : vector<1x1x5x5xf32> to vector<5x5xf32>
    %147 = vector.shape_cast %144 : vector<5x5xf32> to vector<1x1x5x5xf32>
    tpu.vector_store %arg4[%c0_123, %c7_124, %c1_125, %c1_126], %147 {strides = array<i32>} : memref<1x8x7x7xf32, #tpu.memory_space<vmem>>, vector<1x1x5x5xf32>,
    %c0_127 = arith.constant 0 : index
    %c0_128 = arith.constant 0 : index
    %c0_129 = arith.constant 0 : index
    %c0_130 = arith.constant 0 : index
    %148 = vector.load %arg4[%c0_127, %c0_128, %c0_129, %c0_130] : memref<1x8x7x7xf32, #tpu.memory_space<vmem>>, vector<1x8x7x7xf32>
    %149 = vector.shape_cast %148 : vector<1x8x7x7xf32> to vector<1x1x8x7x7xf32>
    %cst = arith.constant dense<0.000000e+00> : vector<1xf32>
    %150 = vector.multi_reduction <add>, %149, %cst [1, 2, 3, 4] : vector<1x1x8x7x7xf32> to vector<1xf32>
    %151 = vector.shape_cast %150 : vector<1xf32> to vector<1x1x1x1x1xf32>
    %152 = vector.extract %151[0, 0, 0, 0, 0] : f32 from vector<1x1x1x1x1xf32>
    %cst_131 = arith.constant 0.00255102036 : f32
    %153 = arith.mulf %152, %cst_131 : f32
    %c0_132 = arith.constant 0 : index
    %c0_133 = arith.constant 0 : index
    %154 = memref.load %arg5[%c0_132, %c0_133] : memref<1x1xf32, #tpu.memory_space<smem>>
    memref.store %153, %arg5[%c0_132, %c0_133] : memref<1x1xf32, #tpu.memory_space<smem>>
    return
  }
}

</mosaic_0001>

<llo_original>
// kernel: model_forward.1
$region0: #{model_forward.1}
  #allocation0 [shape = 'u32[]', space=smem, size = 0x4, offset = 0x4, fixed_abs, tag = 'smem constant byte address 0x4 - core index']
  #allocation1 [shape = 'u32[72,128]{1,0:T(1,128)}', space=vmem, size = 0x9000, scoped, tag = 'internal scratch']
  %s0 = inlined_call_operand.vmem [shape: f32[1,3,5,5], index: 0, kind: input, shape index: {}]
  %s1 = inlined_call_operand.vmem [shape: f32[8,3], index: 1, kind: input, shape index: {}]
  %s2 = inlined_call_operand.vmem [shape: f32[8,1,1], index: 2, kind: input, shape index: {}]
  %s3 = inlined_call_operand.vmem [shape: f32[1,8,7,7], index: 3, kind: input, shape index: {}, may-alias: {3,4}]
  %s4 = inlined_call_operand.vmem [shape: f32[1,8,7,7], index: 4, kind: output, shape index: {0}, may-alias: {3,4}]
  %s5 = inlined_call_operand.hbm [shape: f32[1,1], index: 5, kind: output, shape index: {1}]
  %6 = xla_tuple %s4, %s5
  %s7 = sld [smem:[#allocation0]]
  $region38: #{model_forward.1} parent=0
    _
  %s9 = ssub.s32 1, %s7
  %s10 = scalar_select 0, %s9, %s7
  $region1: #{model_forward.1} parent=0
    #allocation2 [shape = 'u8[4096]{0}', space=smem, size = 0x1000, scoped, tag = 'input window, operand 1, single buffered']
    #allocation3 [shape = 's32[1]{0}', space=sflag, size = 0x4, scoped, tag = 'scoped memory for model_forward.1']
    #allocation4 [shape = 's32[1]{0}', space=sflag, size = 0x4, scoped, tag = 'scoped memory for model_forward.1']
    #allocation5 [shape = 'u8[512]{0}', space=smem, size = 0x200, scoped, tag = 'output window, operand 1, single buffered']
    %11 = vsyncpa [#allocation4], 0
    %12 = vsyncpa [#allocation3], 0
    // Predicated region
    $region2: #{model_forward.1} parent=1 // pred_check
      _
    $region3: #{model_forward.1} parent=1 // pred_check_branch
      %14 = sbr.rel (0) target = $region5
    $region4: #{model_forward.1} parent=1 // pred_region
      _
    $region5: #{model_forward.1} parent=1 // pred_fallthru
      _
    // Predicated region
    $region6: #{model_forward.1} parent=1 // pred_check
      _
    $region7: #{model_forward.1} parent=1 // pred_check_branch
      %16 = sbr.rel (0) target = $region9
    $region8: #{model_forward.1} parent=1 // pred_region
      %18 = vsyncadd [#allocation4], 0
      %s20 = sshll.u32 %s1, 4
      %s21 = int_to_ptr.vmem [resolvable:$true] %s20
      %23 = dma.vmem_to_smem %s21, 128, [#allocation2], [#allocation4]
    $region9: #{model_forward.1} parent=1 // pred_fallthru
      _
    // Predicated region
    $region10: #{model_forward.1} parent=1 // pred_check
      _
    $region11: #{model_forward.1} parent=1 // pred_check_branch
      %25 = sbr.rel (0) target = $region13
    $region12: #{model_forward.1} parent=1 // pred_region
      _
    $region13: #{model_forward.1} parent=1 // pred_fallthru
      _
    // Predicated region
    $region14: #{model_forward.1} parent=1 // pred_check
      _
    $region15: #{model_forward.1} parent=1 // pred_check_branch
      %27 = sbr.rel (0) target = $region17
    $region16: #{model_forward.1} parent=1 // pred_region
      _
    $region17: #{model_forward.1} parent=1 // pred_fallthru
      _
    // Predicated region
    $region18: #{model_forward.1} parent=1 // pred_check
      _
    $region19: #{model_forward.1} parent=1 // pred_check_branch
      %29 = sbr.rel (0) target = $region21
    $region20: #{model_forward.1} parent=1 // pred_region
      %31 = dma.done [#allocation4], 128
    $region21: #{model_forward.1} parent=1 // pred_fallthru
      _
    %32 = sfence
    %v33 = vld [vmem:[%s3] sm:$0x7f]
    %v34 = vld [vmem:[%s3 + $0x8] sm:$0x7f]
    %v35 = vld [vmem:[%s3 + $0x10] sm:$0x7f]
    %v36 = vld [vmem:[%s3 + $0x18] sm:$0x7f]
    %v37 = vld [vmem:[%s3 + $0x20] sm:$0x7f]
    %v38 = vld [vmem:[%s3 + $0x28] sm:$0x7f]
    %v39 = vld [vmem:[%s3 + $0x30] sm:$0x7f]
    %v40 = vld [vmem:[%s3 + $0x38] sm:$0x7f]
    %v41 = vld [vmem:[%s2] sm:$0x1]
    %v42 = vld [vmem:[%s2 + $0x1] sm:$0x1]
    %v43 = vld [vmem:[%s2 + $0x2] sm:$0x1]
    %v44 = vld [vmem:[%s2 + $0x3] sm:$0x1]
    %v45 = vld [vmem:[%s2 + $0x4] sm:$0x1]
    %v46 = vld [vmem:[%s2 + $0x5] sm:$0x1]
    %v47 = vld [vmem:[%s2 + $0x6] sm:$0x1]
    %v48 = vld [vmem:[%s2 + $0x7] sm:$0x1]
    %v57 = vperm.slane %v41, 0
    %v58 = vperm.slane %v42, 0
    %v59 = vperm.slane %v43, 0
    %v60 = vperm.slane %v44, 0
    %v61 = vperm.slane %v45, 0
    %v62 = vperm.slane %v46, 0
    %v63 = vperm.slane %v47, 0
    %v64 = vperm.slane %v48, 0
    %65 = vset.pattern.permute.xlu0 0
    %66 = vperm.xlu0 %65, %v57
    %v67 = vpop.permute.xlu0 %66
    %69 = vset.pattern.permute.xlu0 0
    %70 = vperm.xlu0 %69, %v58
    %v71 = vpop.permute.xlu0 %70
    %73 = vset.pattern.permute.xlu0 0
    %74 = vperm.xlu0 %73, %v59
    %v75 = vpop.permute.xlu0 %74
    %77 = vset.pattern.permute.xlu0 0
    %78 = vperm.xlu0 %77, %v60
    %v79 = vpop.permute.xlu0 %78
    %81 = vset.pattern.permute.xlu0 0
    %82 = vperm.xlu0 %81, %v61
    %v83 = vpop.permute.xlu0 %82
    %85 = vset.pattern.permute.xlu0 0
    %86 = vperm.xlu0 %85, %v62
    %v87 = vpop.permute.xlu0 %86
    %89 = vset.pattern.permute.xlu0 0
    %90 = vperm.xlu0 %89, %v63
    %v91 = vpop.permute.xlu0 %90
    %93 = vset.pattern.permute.xlu0 0
    %94 = vperm.xlu0 %93, %v64
    %v95 = vpop.permute.xlu0 %94
    %v97 = vadd.f32 %v33, %v67
    %v98 = vadd.f32 %v34, %v71
    %v99 = vadd.f32 %v35, %v75
    %v100 = vadd.f32 %v36, %v79
    %v101 = vadd.f32 %v37, %v83
    %v102 = vadd.f32 %v38, %v87
    %v103 = vadd.f32 %v39, %v91
    %v104 = vadd.f32 %v40, %v95
    %vm105 = vcmask 55296
    %106 = vst.msk [vmem:[%s4] sm:$0x7f] %vm105, %v97
    %107 = vst.msk [vmem:[%s4 + $0x8] sm:$0x7f] %vm105, %v98
    %108 = vst.msk [vmem:[%s4 + $0x10] sm:$0x7f] %vm105, %v99
    %109 = vst.msk [vmem:[%s4 + $0x18] sm:$0x7f] %vm105, %v100
    %110 = vst.msk [vmem:[%s4 + $0x20] sm:$0x7f] %vm105, %v101
    %111 = vst.msk [vmem:[%s4 + $0x28] sm:$0x7f] %vm105, %v102
    %112 = vst.msk [vmem:[%s4 + $0x30] sm:$0x7f] %vm105, %v103
    %113 = vst.msk [vmem:[%s4 + $0x38] sm:$0x7f] %vm105, %v104
    %v114 = vld [vmem:[%s0] sm:$0x1f]
    %s115 = scalar_lea.vmem %s0, 8
    %v116 = vld [vmem:[%s115] sm:$0x1f]
    %s117 = scalar_lea.vmem %s0, 16
    %v118 = vld [vmem:[%s117] sm:$0x1f]
    %s119 = sld [smem:[#allocation2]]
    %v120 = vstv %s119
    %v121 = vmul.f32 %v120, %v114
    %s122 = sld [smem:[#allocation2 + $0x1]]
    %v123 = vstv %s122
    %v124 = vmul.f32 %v123, %v116
    %v125 = vadd.f32 %v121, %v124
    %s126 = sld [smem:[#allocation2 + $0x2]]
    %v127 = vstv %s126
    %v128 = vmul.f32 %v127, %v118
    %v129 = vadd.f32 %v125, %v128
    %v130 = vld [vmem:[%s4 + $0x1] sm:$0x1f]
    %132 = vrot.lane.b32.xlu0 %v129, 1
    %v133 = vpop.permute.xlu0 %132
    %v135 = vadd.f32 %v130, %v133
    %vm136 = vcmask 45064
    %137 = vst.msk [vmem:[%s4 + $0x1] sm:$0x1f] %vm136, %v135
    %s138 = sld [smem:[#allocation2 + $0x80]]
    %v139 = vstv %s138
    %v140 = vmul.f32 %v139, %v114
    %s141 = sld [smem:[#allocation2 + $0x81]]
    %v142 = vstv %s141
    %v143 = vmul.f32 %v142, %v116
    %v144 = vadd.f32 %v140, %v143
    %s145 = sld [smem:[#allocation2 + $0x82]]
    %v146 = vstv %s145
    %v147 = vmul.f32 %v146, %v118
    %v148 = vadd.f32 %v144, %v147
    %s149 = scalar_lea.vmem %s4, 8
    %v150 = vld [vmem:[%s149 + $0x1] sm:$0x1f]
    %152 = vrot.lane.b32.xlu0 %v148, 1
    %v153 = vpop.permute.xlu0 %152
    %v155 = vadd.f32 %v150, %v153
    %156 = vst.msk [vmem:[%s149 + $0x1] sm:$0x1f] %vm136, %v155
    %s157 = sld [smem:[#allocation2 + $0x100]]
    %v158 = vstv %s157
    %v159 = vmul.f32 %v158, %v114
    %s160 = sld [smem:[#allocation2 + $0x101]]
    %v161 = vstv %s160
    %v162 = vmul.f32 %v161, %v116
    %v163 = vadd.f32 %v159, %v162
    %s164 = sld [smem:[#allocation2 + $0x102]]
    %v165 = vstv %s164
    %v166 = vmul.f32 %v165, %v118
    %v167 = vadd.f32 %v163, %v166
    %s168 = scalar_lea.vmem %s4, 16
    %v169 = vld [vmem:[%s168 + $0x1] sm:$0x1f]
    %171 = vrot.lane.b32.xlu0 %v167, 1
    %v172 = vpop.permute.xlu0 %171
    %v174 = vadd.f32 %v169, %v172
    %175 = vst.msk [vmem:[%s168 + $0x1] sm:$0x1f] %vm136, %v174
    %s176 = sld [smem:[#allocation2 + $0x180]]
    %v177 = vstv %s176
    %v178 = vmul.f32 %v177, %v114
    %s179 = sld [smem:[#allocation2 + $0x181]]
    %v180 = vstv %s179
    %v181 = vmul.f32 %v180, %v116
    %v182 = vadd.f32 %v178, %v181
    %s183 = sld [smem:[#allocation2 + $0x182]]
    %v184 = vstv %s183
    %v185 = vmul.f32 %v184, %v118
    %v186 = vadd.f32 %v182, %v185
    %s187 = scalar_lea.vmem %s4, 24
    %v188 = vld [vmem:[%s187 + $0x1] sm:$0x1f]
    %190 = vrot.lane.b32.xlu0 %v186, 1
    %v191 = vpop.permute.xlu0 %190
    %v193 = vadd.f32 %v188, %v191
    %194 = vst.msk [vmem:[%s187 + $0x1] sm:$0x1f] %vm136, %v193
    %s195 = sld [smem:[#allocation2 + $0x200]]
    %v196 = vstv %s195
    %v197 = vmul.f32 %v196, %v114
    %s198 = sld [smem:[#allocation2 + $0x201]]
    %v199 = vstv %s198
    %v200 = vmul.f32 %v199, %v116
    %v201 = vadd.f32 %v197, %v200
    %s202 = sld [smem:[#allocation2 + $0x202]]
    %v203 = vstv %s202
    %v204 = vmul.f32 %v203, %v118
    %v205 = vadd.f32 %v201, %v204
    %s206 = scalar_lea.vmem %s4, 32
    %v207 = vld [vmem:[%s206 + $0x1] sm:$0x1f]
    %209 = vrot.lane.b32.xlu0 %v205, 1
    %v210 = vpop.permute.xlu0 %209
    %v212 = vadd.f32 %v207, %v210
    %213 = vst.msk [vmem:[%s206 + $0x1] sm:$0x1f] %vm136, %v212
    %s214 = sld [smem:[#allocation2 + $0x280]]
    %v215 = vstv %s214
    %v216 = vmul.f32 %v215, %v114
    %s217 = sld [smem:[#allocation2 + $0x281]]
    %v218 = vstv %s217
    %v219 = vmul.f32 %v218, %v116
    %v220 = vadd.f32 %v216, %v219
    %s221 = sld [smem:[#allocation2 + $0x282]]
    %v222 = vstv %s221
    %v223 = vmul.f32 %v222, %v118
    %v224 = vadd.f32 %v220, %v223
    %s225 = scalar_lea.vmem %s4, 40
    %v226 = vld [vmem:[%s225 + $0x1] sm:$0x1f]
    %228 = vrot.lane.b32.xlu0 %v224, 1
    %v229 = vpop.permute.xlu0 %228
    %v231 = vadd.f32 %v226, %v229
    %232 = vst.msk [vmem:[%s225 + $0x1] sm:$0x1f] %vm136, %v231
    %s233 = sld [smem:[#allocation2 + $0x300]]
    %v234 = vstv %s233
    %v235 = vmul.f32 %v234, %v114
    %s236 = sld [smem:[#allocation2 + $0x301]]
    %v237 = vstv %s236
    %v238 = vmul.f32 %v237, %v116
    %v239 = vadd.f32 %v235, %v238
    %s240 = sld [smem:[#allocation2 + $0x302]]
    %v241 = vstv %s240
    %v242 = vmul.f32 %v241, %v118
    %v243 = vadd.f32 %v239, %v242
    %s244 = scalar_lea.vmem %s4, 48
    %v245 = vld [vmem:[%s244 + $0x1] sm:$0x1f]
    %247 = vrot.lane.b32.xlu0 %v243, 1
    %v248 = vpop.permute.xlu0 %247
    %v250 = vadd.f32 %v245, %v248
    %251 = vst.msk [vmem:[%s244 + $0x1] sm:$0x1f] %vm136, %v250
    %s252 = sld [smem:[#allocation2 + $0x380]]
    %v253 = vstv %s252
    %v254 = vmul.f32 %v253, %v114
    %s255 = sld [smem:[#allocation2 + $0x381]]
    %v256 = vstv %s255
    %v257 = vmul.f32 %v256, %v116
    %v258 = vadd.f32 %v254, %v257
    %s259 = sld [smem:[#allocation2 + $0x382]]
    %v260 = vstv %s259
    %v261 = vmul.f32 %v260, %v118
    %v262 = vadd.f32 %v258, %v261
    %s263 = scalar_lea.vmem %s4, 56
    %v264 = vld [vmem:[%s263 + $0x1] sm:$0x1f]
    %266 = vrot.lane.b32.xlu0 %v262, 1
    %v267 = vpop.permute.xlu0 %266
    %v269 = vadd.f32 %v264, %v267
    %270 = vst.msk [vmem:[%s263 + $0x1] sm:$0x1f] %vm136, %v269
    %v271 = vld [vmem:[%s4] sm:$0x7f]
    %v272 = vld [vmem:[%s4 + $0x8] sm:$0x7f]
    %v273 = vld [vmem:[%s4 + $0x10] sm:$0x7f]
    %v274 = vld [vmem:[%s4 + $0x18] sm:$0x7f]
    %v275 = vld [vmem:[%s4 + $0x20] sm:$0x7f]
    %v276 = vld [vmem:[%s4 + $0x28] sm:$0x7f]
    %v277 = vld [vmem:[%s4 + $0x30] sm:$0x7f]
    %v278 = vld [vmem:[%s4 + $0x38] sm:$0x7f]
    %v279 = vsel %vm105, %v271, 0.0
    %v280 = vsel %vm105, %v272, 0.0
    %v281 = vadd.f32 %v279, %v280
    %v282 = vsel %vm105, %v273, 0.0
    %v283 = vadd.f32 %v281, %v282
    %v284 = vsel %vm105, %v274, 0.0
    %v285 = vadd.f32 %v283, %v284
    %v286 = vsel %vm105, %v275, 0.0
    %v287 = vadd.f32 %v285, %v286
    %v288 = vsel %vm105, %v276, 0.0
    %v289 = vadd.f32 %v287, %v288
    %v290 = vsel %vm105, %v277, 0.0
    %v291 = vadd.f32 %v289, %v290
    %v292 = vsel %vm105, %v278, 0.0
    %v293 = vadd.f32 %v291, %v292
    %294 = vadd.xlane.f32.xlu0 %v293
    %v295 = vpop.xlane.xlu0 %294
    %v296 = vrot.slane %v295, 4
    %v297 = vadd.f32 %v295, %v296
    %v298 = vrot.slane %v297, 2
    %v299 = vadd.f32 %v297, %v298
    %v300 = vrot.slane %v299, 1
    %v301 = vadd.f32 %v299, %v300
    %s302 = vtos %v301
    %s303 = smul.f32 %s302, 0.0025510204
    %s304 = scalar_lea.smem [#allocation5], 0
    %305 = sst [smem:[%s304]] %s303
    // Predicated region
    $region22: #{model_forward.1} parent=1 // pred_check
      _
    $region23: #{model_forward.1} parent=1 // pred_check_branch
      %307 = sbr.rel (0) target = $region25
    $region24: #{model_forward.1} parent=1 // pred_region
      _
    $region25: #{model_forward.1} parent=1 // pred_fallthru
      _
    // Predicated region
    $region26: #{model_forward.1} parent=1 // pred_check
      _
    $region27: #{model_forward.1} parent=1 // pred_check_branch
      %309 = sbr.rel (0) target = $region29
    $region28: #{model_forward.1} parent=1 // pred_region
      %311 = vsyncadd [#allocation3], 0
      %s313 = sshll.u32 %s5, 4
      %s314 = int_to_ptr.hbm [resolvable:$true] %s313
      %316 = dma.smem_to_hbm [#allocation5], 16, %s314, [#allocation3]
    $region29: #{model_forward.1} parent=1 // pred_fallthru
      _
    // Predicated region
    $region30: #{model_forward.1} parent=1 // pred_check
      _
    $region31: #{model_forward.1} parent=1 // pred_check_branch
      %318 = sbr.rel (0) target = $region33
    $region32: #{model_forward.1} parent=1 // pred_region
      _
    $region33: #{model_forward.1} parent=1 // pred_fallthru
      _
    // Predicated region
    $region34: #{model_forward.1} parent=1 // pred_check
      _
    $region35: #{model_forward.1} parent=1 // pred_check_branch
      %320 = sbr.rel (0) target = $region37
    $region36: #{model_forward.1} parent=1 // pred_region
      %322 = dma.done [#allocation3], 16
    $region37: #{model_forward.1} parent=1 // pred_fallthru
      _
    %323 = sfence
    %324 = vsyncpa [#allocation3], 1
    %325 = vsyncpa [#allocation4], 1

</llo_original>
